<compile_context>
chip_gen: v7x
topology: tpu7x:2x2x1
jax: 0.10.0
libtpu: 0.0.40
codegen_flags: <defaults>
</compile_context>

<pallas_src>
import math
from functools import partial

import numpy as np
import jax
import jax.numpy as jnp
from jax import lax
from jax.experimental import pallas as pl
from jax.experimental.pallas import tpu as pltpu


_VMEM_LIMIT = 32 * 1024 * 1024


def _round_up(a, b):
    return ((a + b - 1) // b) * b


# ----------------------------------------------------------------------------
# Fused pixel-stage kernel (channel-major, pixel-lane-dense):
#   f^T      = relu(W1^T @ x^T + b1^T)            (features, VMEM only)
#   logits^T = W2^T @ f^T + b2^T                  (lane-dense [nc, tile_n] store)
#   acc[T,128] += onehot_t @ [f | 1 | onehot_g | 0]   (ONE fused MXU contraction:
#     cols [0:Cf] token feature sums, [Cf] pixel counts,
#     cols [Cf+1:Cf+1+L] per-class label histogram)
# Per-core partial accumulators; reduced + finalized (mean / argmax) in wrapper.
# ----------------------------------------------------------------------------
def _cnn_pool_kernel(x_ref, tg_ref, w1t_ref, b1t_ref, w2t_ref, b2t_ref,
                     logit_ref, acc_ref, *, num_label_classes):
    @pl.when(pl.program_id(1) == 0)
    def _():
        acc_ref[...] = jnp.zeros_like(acc_ref)

    x = x_ref[...]                                               # [Cin, tn] bf16
    f = jnp.dot(w1t_ref[...], x, preferred_element_type=jnp.float32) + b1t_ref[...]
    f = jnp.maximum(f, 0.0)                                      # [Cf, tn] f32
    fb = f.astype(jnp.bfloat16)

    # lane-dense CNN class logits, stored transposed [nc, tn]
    logit_ref[...] = (jnp.dot(w2t_ref[...], fb, preferred_element_type=jnp.float32)
                      + b2t_ref[...])

    tn = x.shape[1]
    Cf = f.shape[0]
    T = acc_ref.shape[1]
    L = num_label_classes
    acc_lanes = acc_ref.shape[2]

    tg = tg_ref[...]                                             # [2, tn] int32
    tid_row = tg[0:1, :]                                         # packed token id
    gt_row = tg[1:2, :]                                          # pixel label
    onehot_t = (tid_row == lax.broadcasted_iota(jnp.int32, (T, tn), 0)
                ).astype(jnp.bfloat16)                           # [T, tn]
    onehot_g = (gt_row == lax.broadcasted_iota(jnp.int32, (L, tn), 0)
                ).astype(jnp.bfloat16)                           # [L, tn]

    # single fused pooling contraction; rhs rows = [features | 1 | label 1-hot | 0-pad]
    pad_rows = acc_lanes - (Cf + 1 + L)
    rhs = jnp.concatenate(
        [fb,
         jnp.ones((1, tn), jnp.bfloat16),
         onehot_g,
         jnp.zeros((pad_rows, tn), jnp.bfloat16)], axis=0)       # [acc_lanes, tn]
    upd = lax.dot_general(onehot_t, rhs, (((1,), (1,)), ((), ())),
                          preferred_element_type=jnp.float32)    # [T, acc_lanes]
    acc_ref[...] = acc_ref[...] + upd[None, :, :]


def cnn_pool_pallas(x_t, tg, w1, b1, w2, b2, T, num_label_classes,
                    tile_n_max=2048, n_par=2):
    Cin, N = x_t.shape
    Cf = w1.shape[1]
    nc = w2.shape[1]
    acc_lanes = _round_up(Cf + 1 + num_label_classes, 128)

    # split pixel rows into n_par "parallel" chunks (dual-TC v7x), each chunk
    # iterated with the largest lane-aligned tile that fits.
    per_core = -(-N // n_par)
    tile_n = min(tile_n_max, _round_up(per_core, 128))
    per_core_pad = _round_up(per_core, tile_n)
    N_pad = n_par * per_core_pad
    n_chunks = per_core_pad // tile_n

    if N_pad != N:
        x_t = jnp.pad(x_t, ((0, 0), (0, N_pad - N)))
        tg = jnp.pad(tg, ((0, 0), (0, N_pad - N)), constant_values=-1)

    w1t = w1.T.astype(jnp.bfloat16)           # [Cf, Cin]
    b1t = b1.reshape(Cf, 1)                   # [Cf, 1]
    w2t = w2.T.astype(jnp.bfloat16)           # [nc, Cf]
    b2t = b2.reshape(nc, 1)                   # [nc, 1]

    kern = partial(_cnn_pool_kernel, num_label_classes=num_label_classes)
    logit_t, acc = pl.pallas_call(
        kern,
        out_shape=(jax.ShapeDtypeStruct((nc, N_pad), jnp.float32),          # logits^T
                   jax.ShapeDtypeStruct((n_par, T, acc_lanes), jnp.float32)),  # partials
        grid_spec=pltpu.PrefetchScalarGridSpec(
            num_scalar_prefetch=0, grid=(n_par, n_chunks),
            in_specs=[pl.BlockSpec((Cin, tile_n), lambda c, i: (0, c * n_chunks + i)),
                      pl.BlockSpec((2, tile_n), lambda c, i: (0, c * n_chunks + i)),
                      pl.BlockSpec((Cf, Cin), lambda c, i: (0, 0)),
                      pl.BlockSpec((Cf, 1), lambda c, i: (0, 0)),
                      pl.BlockSpec((nc, Cf), lambda c, i: (0, 0)),
                      pl.BlockSpec((nc, 1), lambda c, i: (0, 0))],
            out_specs=[pl.BlockSpec((nc, tile_n), lambda c, i: (0, c * n_chunks + i)),
                       pl.BlockSpec((1, T, acc_lanes), lambda c, i: (c, 0, 0))]),
        compiler_params=pltpu.CompilerParams(
            dimension_semantics=("parallel", "arbitrary"),
            vmem_limit_bytes=_VMEM_LIMIT),
    )(x_t, tg, w1t, b1t, w2t, b2t)

    acc = acc.sum(axis=0)                                        # reduce core partials
    cnt = jnp.maximum(acc[:, Cf:Cf + 1], 1.0)
    tok_mean = acc[:, :Cf] / cnt                                 # segment mean
    lbl_hist = acc[:, Cf + 1:Cf + 1 + num_label_classes]
    return logit_t[:, :N], tok_mean, lbl_hist


# ----------------------------------------------------------------------------
# Transformer kernel: one image per grid step (grid=(B,), "parallel").
#   qkv = x @ [Wq|Wk|Wv] ; s = q k^T / sqrt(D) ; p = softmax(s)
#   Create_mask semantics: padding mask applied AFTER softmax
#   out = ((p v) Wo + bo + x) Wc + bc           (classifier output lane-padded)
# ----------------------------------------------------------------------------
def _attn_kernel(x_ref, vcol_ref, vrow_ref, wqkv_ref, bqkv_ref,
                 wo_ref, bo_ref, wc_ref, bc_ref, out_ref):
    x = x_ref[0]                                                 # [L, D] f32
    D = x.shape[1]
    scale = 1.0 / math.sqrt(D)
    xb = x.astype(jnp.bfloat16)
    qkv = jnp.dot(xb, wqkv_ref[...], preferred_element_type=jnp.float32) + bqkv_ref[...]
    q = qkv[:, 0 * D:1 * D]
    k = qkv[:, 1 * D:2 * D]
    v = qkv[:, 2 * D:3 * D]
    s = lax.dot_general(q.astype(jnp.bfloat16), k.astype(jnp.bfloat16),
                        (((1,), (1,)), ((), ())),
                        preferred_element_type=jnp.float32) * scale      # [L, L]
    m = jnp.max(s, axis=-1, keepdims=True)
    e = jnp.exp(s - m)
    p = e * pl.reciprocal(jnp.sum(e, axis=-1, keepdims=True), approx=True)
    p = p * (vcol_ref[0] * vrow_ref[0])           # Create_mask: applied post-softmax
    o = jnp.dot(p.astype(jnp.bfloat16), v.astype(jnp.bfloat16),
                preferred_element_type=jnp.float32)
    y = (jnp.dot(o.astype(jnp.bfloat16), wo_ref[...],
                 preferred_element_type=jnp.float32) + bo_ref[...] + x)
    out_ref[0] = (jnp.dot(y.astype(jnp.bfloat16), wc_ref[...],
                          preferred_element_type=jnp.float32) + bc_ref[...])


def transformer_pallas(tokens, valid, p):
    B, L, D = tokens.shape
    nc = p["wc"].shape[1]
    nc_pad = _round_up(nc, 128)                     # lane-dense classifier output
    bf = jnp.bfloat16
    wqkv = jnp.concatenate([p["wq"], p["wk"], p["wv"]], axis=1).astype(bf)  # [D, 3D]
    bqkv = jnp.concatenate([p["bq"], p["bk"], p["bv"]], axis=1)             # [1, 3D]
    wc = jnp.pad(p["wc"], ((0, 0), (0, nc_pad - nc))).astype(bf)            # [D, ncp]
    bc = jnp.pad(p["bc"], ((0, 0), (0, nc_pad - nc)))                       # [1, ncp]
    vcol = valid.reshape(B, L, 1).astype(jnp.float32)
    vrow = valid.reshape(B, 1, L).astype(jnp.float32)

    out = pl.pallas_call(
        _attn_kernel,
        out_shape=jax.ShapeDtypeStruct((B, L, nc_pad), jnp.float32),
        grid_spec=pltpu.PrefetchScalarGridSpec(
            num_scalar_prefetch=0, grid=(B,),
            in_specs=[pl.BlockSpec((1, L, D), lambda b: (b, 0, 0)),
                      pl.BlockSpec((1, L, 1), lambda b: (b, 0, 0)),
                      pl.BlockSpec((1, 1, L), lambda b: (b, 0, 0)),
                      pl.BlockSpec((D, 3 * D), lambda b: (0, 0)),
                      pl.BlockSpec((1, 3 * D), lambda b: (0, 0)),
                      pl.BlockSpec((D, D), lambda b: (0, 0)),
                      pl.BlockSpec((1, D), lambda b: (0, 0)),
                      pl.BlockSpec((D, nc_pad), lambda b: (0, 0)),
                      pl.BlockSpec((1, nc_pad), lambda b: (0, 0))],
            out_specs=pl.BlockSpec((1, L, nc_pad), lambda b: (b, 0, 0))),
        compiler_params=pltpu.CompilerParams(
            dimension_semantics=("parallel",),
            vmem_limit_bytes=_VMEM_LIMIT),
    )(tokens.astype(jnp.float32), vcol, vrow, wqkv, bqkv,
      p["wo"].astype(bf), p["bo"], wc, bc)
    return out[:, :, :nc]


# ------------------------------- Forward glue --------------------------------
def irgs_trans_forward(img, gts, segments, n_tokens, params, max_length,
                       num_label_classes, tile_n_max=2048):
    B, Cin, H, W = img.shape
    N = B * H * W
    Cf = params["w1"].shape[1]
    nc = params["w2"].shape[1]
    T = B * max_length

    # channel-major, pixel-lane-dense layout for the fused CNN+pool kernel
    x_t = jnp.transpose(img, (1, 0, 2, 3)).reshape(Cin, N).astype(jnp.bfloat16)

    # Extract_tokens (random_tokens=False, mix_images=False): token t of image b
    # mean-pools pixels whose 0-based segment id == t; packed per image.
    tid = (jnp.arange(B, dtype=jnp.int32)[:, None] * max_length
           + segments.reshape(B, H * W).astype(jnp.int32)).reshape(1, N)
    gt = gts.reshape(1, N).astype(jnp.int32)
    tg = jnp.concatenate([tid, gt], axis=0)                      # [2, N] lane-dense

    logit_t, tok_mean, lbl_hist = cnn_pool_pallas(
        x_t, tg, params["w1"], params["b1"], params["w2"], params["b2"],
        T, num_label_classes, tile_n_max=tile_n_max)

    cnn_logits = jnp.transpose(logit_t.reshape(nc, B, H, W), (1, 0, 2, 3))
    tokens = tok_mean.reshape(B, max_length, Cf)
    # torch.mode over integer labels == argmax of the per-class histogram
    # (ties -> smallest class, same as torch.mode); padded slots -> 0.0.
    super_labels = jnp.argmax(lbl_hist, axis=-1).astype(jnp.float32).reshape(B, max_length)

    # Create_mask; the [B, L, L] attention mask is never materialized in HBM —
    # it is rebuilt in-kernel from the per-token validity row/column vectors.
    n_tok = jnp.asarray(np.asarray(n_tokens), jnp.int32).reshape(B, 1)
    mask = (jnp.arange(max_length, dtype=jnp.int32)[None, :] < n_tok).astype(jnp.float32)

    trans_logits = transformer_pallas(tokens, mask, params)

    # tokens_ids and offset segments (as Extract_tokens mutates them)
    n_np = np.asarray(n_tokens, dtype=np.int64)
    offs = np.concatenate([[0], np.cumsum(n_np)[:-1]])
    tokens_ids = jnp.concatenate(
        [jnp.arange(int(n_np[b]), dtype=jnp.int32) + int(offs[b]) + 1
         for b in range(len(n_np))])
    segments_out = segments.astype(jnp.int32) + jnp.asarray(offs, jnp.int32)[:, None, None] + 1

    return cnn_logits, trans_logits, super_labels, mask, tokens_ids, segments_out


# ------------------------------- Parameters ----------------------------------
def init_params(key, cin, cf, nc):
    ks = jax.random.split(key, 7)
    return {
        "w1": jax.random.normal(ks[0], (cin, cf), jnp.float32) * math.sqrt(2.0 / cin),
        "b1": jnp.zeros((1, cf), jnp.float32),
        "w2": jax.random.normal(ks[1], (cf, nc), jnp.float32) * math.sqrt(2.0 / cf),
        "b2": jnp.zeros((1, nc), jnp.float32),
        "wq": jax.random.normal(ks[2], (cf, cf), jnp.float32) * 0.02,
        "wk": jax.random.normal(ks[3], (cf, cf), jnp.float32) * 0.02,
        "wv": jax.random.normal(ks[4], (cf, cf), jnp.float32) * 0.02,
        "wo": jax.random.normal(ks[5], (cf, cf), jnp.float32) * 0.02,
        "wc": jax.random.normal(ks[6], (cf, nc), jnp.float32) * 0.02,
        "bq": jnp.zeros((1, cf), jnp.float32),
        "bk": jnp.zeros((1, cf), jnp.float32),
        "bv": jnp.zeros((1, cf), jnp.float32),
        "bo": jnp.zeros((1, cf), jnp.float32),
        "bc": jnp.zeros((1, nc), jnp.float32),
    }


if __name__ == "__main__":
    # TODO(synk): torch.randperm-based random_tokens / mix_images shuffling is
    # nondeterministic data routing; implemented the deterministic
    # (random_tokens=False, mix_images=False) configuration.
    key = jax.random.PRNGKey(0)
    B, Cin, H, W = 2, 4, 16, 16
    Cf, NUM_CLASSES, MAX_LENGTH = 32, 8, 16
    n_tokens = np.array([12, 16], dtype=np.int32)        # per-image superpixel counts

    k_img, k_gts, k_par = jax.random.split(key, 3)
    img = jax.random.normal(k_img, (B, Cin, H, W), jnp.float32)
    gts = jax.random.randint(k_gts, (B, H, W), 0, NUM_CLASSES).astype(jnp.int32)

    segs = []
    for b in range(B):
        kb = jax.random.fold_in(key, b + 100)
        s = jax.random.randint(kb, (H * W,), 0, int(n_tokens[b]))
        s = s.at[: int(n_tokens[b])].set(jnp.arange(int(n_tokens[b])))  # every id present
        segs.append(s.reshape(H, W))
    segments = jnp.stack(segs).astype(jnp.int32)

    params = init_params(k_par, Cin, Cf, NUM_CLASSES)

    outs = irgs_trans_forward(img, gts, segments, n_tokens, params,
                              MAX_LENGTH, NUM_CLASSES)
    outs = jax.block_until_ready(outs)
    cnn_logits, trans_logits, super_labels, mask, tokens_ids, segments_out = outs
    assert cnn_logits.shape == (B, NUM_CLASSES, H, W)
    assert trans_logits.shape == (B, MAX_LENGTH, NUM_CLASSES)
    assert super_labels.shape == (B, MAX_LENGTH)
    assert mask.shape == (B, MAX_LENGTH)
    assert tokens_ids.shape == (int(n_tokens.sum()),)
    print("KERNEL_OK")
</pallas_src>

<mosaic_0001>
module attributes {stable_mosaic.version = 11 : i64} {
  func.func @_cnn_pool_kernel(%arg0: i32, %arg1: i32, %arg2: memref<4x256xbf16, #tpu.memory_space<vmem>>, %arg3: memref<2x256xi32, #tpu.memory_space<vmem>>, %arg4: memref<32x4xbf16, #tpu.memory_space<vmem>>, %arg5: memref<32x1xf32, #tpu.memory_space<vmem>>, %arg6: memref<8x32xbf16, #tpu.memory_space<vmem>>, %arg7: memref<8x1xf32, #tpu.memory_space<vmem>>, %arg8: memref<8x256xf32, #tpu.memory_space<vmem>>, %arg9: memref<1x32x128xf32, #tpu.memory_space<vmem>>) attributes {dimension_semantics = [#tpu.dimension_semantics<parallel>, #tpu.dimension_semantics<arbitrary>], iteration_bounds = array<i64: 2, 1>, scalar_prefetch = 0 : i64, scratch_operands = 0 : i64, tpu.core_type = #tpu.core_type<tc>, window_params = [{transform_indices = @transform_0, window_bounds = array<i64: 4, 256>}, {transform_indices = @transform_1, window_bounds = array<i64: 2, 256>}, {pipeline_mode = #tpu.pipeline_mode<synchronous>, transform_indices = @transform_2, window_bounds = array<i64: 32, 4>}, {pipeline_mode = #tpu.pipeline_mode<synchronous>, transform_indices = @transform_3, window_bounds = array<i64: 32, 1>}, {pipeline_mode = #tpu.pipeline_mode<synchronous>, transform_indices = @transform_4, window_bounds = array<i64: 8, 32>}, {pipeline_mode = #tpu.pipeline_mode<synchronous>, transform_indices = @transform_5, window_bounds = array<i64: 8, 1>}, {transform_indices = @transform_6, window_bounds = array<i64: 8, 256>}, {transform_indices = @transform_7, window_bounds = array<i64: 1, 32, 128>}]} {
    %c0_i32 = arith.constant 0 : i32
    %0 = arith.cmpi eq, %arg1, %c0_i32 : i32
    %1 = arith.extui %0 : i1 to i32
    %c0_i32_0 = arith.constant 0 : i32
    %2 = arith.cmpi ne, %1, %c0_i32_0 : i32
    scf.if %2 {
      %cst_25 = arith.constant 0.000000e+00 : f32
      %41 = vector.broadcast %cst_25 : f32 to vector<1x32x128xf32>
      %c0_26 = arith.constant 0 : index
      %c0_27 = arith.constant 0 : index
      %c0_28 = arith.constant 0 : index
      %42 = vector.load %arg9[%c0_26, %c0_27, %c0_28] : memref<1x32x128xf32, #tpu.memory_space<vmem>>, vector<1x32x128xf32>
      tpu.vector_store %arg9[%c0_26, %c0_27, %c0_28], %41 {strides = array<i32>} : memref<1x32x128xf32, #tpu.memory_space<vmem>>, vector<1x32x128xf32>,
    } else {
    }
    %c0 = arith.constant 0 : index
    %c0_1 = arith.constant 0 : index
    %3 = vector.load %arg2[%c0, %c0_1] : memref<4x256xbf16, #tpu.memory_space<vmem>>, vector<4x256xbf16>
    %c0_2 = arith.constant 0 : index
    %c0_3 = arith.constant 0 : index
    %4 = vector.load %arg4[%c0_2, %c0_3] : memref<32x4xbf16, #tpu.memory_space<vmem>>, vector<32x4xbf16>
    %cst = arith.constant dense<0.000000e+00> : vector<32x256xf32>
    %5 = tpu.matmul %4, %3, %cst {dimension_numbers = #tpu.dot_dimension_numbers<[1], [0], [0], [1], [0, 0, 1, 1], [], []>} : vector<32x4xbf16>, vector<4x256xbf16>, vector<32x256xf32> -> vector<32x256xf32>
    %c0_4 = arith.constant 0 : index
    %c0_5 = arith.constant 0 : index
    %6 = vector.load %arg5[%c0_4, %c0_5] : memref<32x1xf32, #tpu.memory_space<vmem>>, vector<32x1xf32>
    %7 = vector.broadcast %6 : vector<32x1xf32> to vector<32x256xf32>
    %8 = arith.addf %5, %7 : vector<32x256xf32>
    %cst_6 = arith.constant 0.000000e+00 : f32
    %9 = vector.broadcast %cst_6 : f32 to vector<32x256xf32>
    %10 = arith.maximumf %8, %9 : vector<32x256xf32>
    %11 = arith.truncf %10 : vector<32x256xf32> to vector<32x256xbf16>
    %c0_7 = arith.constant 0 : index
    %c0_8 = arith.constant 0 : index
    %12 = vector.load %arg6[%c0_7, %c0_8] : memref<8x32xbf16, #tpu.memory_space<vmem>>, vector<8x32xbf16>
    %cst_9 = arith.constant dense<0.000000e+00> : vector<8x256xf32>
    %13 = tpu.matmul %12, %11, %cst_9 {dimension_numbers = #tpu.dot_dimension_numbers<[1], [0], [0], [1], [0, 0, 1, 1], [], []>} : vector<8x32xbf16>, vector<32x256xbf16>, vector<8x256xf32> -> vector<8x256xf32>
    %c0_10 = arith.constant 0 : index
    %c0_11 = arith.constant 0 : index
    %14 = vector.load %arg7[%c0_10, %c0_11] : memref<8x1xf32, #tpu.memory_space<vmem>>, vector<8x1xf32>
    %15 = vector.broadcast %14 : vector<8x1xf32> to vector<8x256xf32>
    %16 = arith.addf %13, %15 : vector<8x256xf32>
    %c0_12 = arith.constant 0 : index
    %c0_13 = arith.constant 0 : index
    %17 = vector.load %arg8[%c0_12, %c0_13] : memref<8x256xf32, #tpu.memory_space<vmem>>, vector<8x256xf32>
    tpu.vector_store %arg8[%c0_12, %c0_13], %16 {strides = array<i32>} : memref<8x256xf32, #tpu.memory_space<vmem>>, vector<8x256xf32>,
    %c0_14 = arith.constant 0 : index
    %c0_15 = arith.constant 0 : index
    %18 = vector.load %arg3[%c0_14, %c0_15] : memref<2x256xi32, #tpu.memory_space<vmem>>, vector<2x256xi32>
    %19 = vector.extract_strided_slice %18 {offsets = [0, 0], sizes = [1, 256], strides = [1, 1]} : vector<2x256xi32> to vector<1x256xi32>
    %20 = vector.extract_strided_slice %18 {offsets = [1, 0], sizes = [1, 256], strides = [1, 1]} : vector<2x256xi32> to vector<1x256xi32>
    %21 = tpu.iota {dimensions = array<i32: 0>} : vector<32x256xi32>
    %22 = vector.broadcast %19 : vector<1x256xi32> to vector<32x256xi32>
    %23 = arith.cmpi eq, %22, %21 : vector<32x256xi32>
    %24 = arith.extui %23 : vector<32x256xi1> to vector<32x256xi32>
    %25 = arith.sitofp %24 : vector<32x256xi32> to vector<32x256xf32>
    %26 = arith.truncf %25 : vector<32x256xf32> to vector<32x256xbf16>
    %27 = tpu.iota {dimensions = array<i32: 0>} : vector<8x256xi32>
    %28 = vector.broadcast %20 : vector<1x256xi32> to vector<8x256xi32>
    %29 = arith.cmpi eq, %28, %27 : vector<8x256xi32>
    %30 = arith.extui %29 : vector<8x256xi1> to vector<8x256xi32>
    %31 = arith.sitofp %30 : vector<8x256xi32> to vector<8x256xf32>
    %32 = arith.truncf %31 : vector<8x256xf32> to vector<8x256xbf16>
    %cst_16 = arith.constant 1.000000e+00 : bf16
    %33 = vector.broadcast %cst_16 : bf16 to vector<1x256xbf16>
    %cst_17 = arith.constant 0.000000e+00 : bf16
    %34 = vector.broadcast %cst_17 : bf16 to vector<87x256xbf16>
    %35 = tpu.concatenate %11, %33, %32, %34 in 0 : vector<32x256xbf16>, vector<1x256xbf16>, vector<8x256xbf16>, vector<87x256xbf16> -> vector<128x256xbf16>
    %cst_18 = arith.constant dense<0.000000e+00> : vector<32x128xf32>
    %36 = tpu.matmul %26, %35, %cst_18 {dimension_numbers = #tpu.dot_dimension_numbers<[1], [1], [0], [0], [0, 0, 1, 0], [], []>} : vector<32x256xbf16>, vector<128x256xbf16>, vector<32x128xf32> -> vector<32x128xf32>
    %c0_19 = arith.constant 0 : index
    %c0_20 = arith.constant 0 : index
    %c0_21 = arith.constant 0 : index
    %37 = vector.load %arg9[%c0_19, %c0_20, %c0_21] : memref<1x32x128xf32, #tpu.memory_space<vmem>>, vector<1x32x128xf32>
    %38 = vector.shape_cast %36 : vector<32x128xf32> to vector<1x32x128xf32>
    %39 = arith.addf %37, %38 : vector<1x32x128xf32>
    %c0_22 = arith.constant 0 : index
    %c0_23 = arith.constant 0 : index
    %c0_24 = arith.constant 0 : index
    %40 = vector.load %arg9[%c0_22, %c0_23, %c0_24] : memref<1x32x128xf32, #tpu.memory_space<vmem>>, vector<1x32x128xf32>
    tpu.vector_store %arg9[%c0_22, %c0_23, %c0_24], %39 {strides = array<i32>} : memref<1x32x128xf32, #tpu.memory_space<vmem>>, vector<1x32x128xf32>,
    return
  }
  func.func @transform_0(%arg0: i32, %arg1: i32) -> (i32, i32) {
    %c1_i32 = arith.constant 1 : i32
    %0 = arith.muli %arg0, %c1_i32 : i32
    %1 = arith.addi %0, %arg1 : i32
    %c0_i32 = arith.constant 0 : i32
    %c0_i32_0 = arith.constant 0 : i32
    return %c0_i32, %1 : i32, i32
  }
  func.func @transform_1(%arg0: i32, %arg1: i32) -> (i32, i32) {
    %c1_i32 = arith.constant 1 : i32
    %0 = arith.muli %arg0, %c1_i32 : i32
    %1 = arith.addi %0, %arg1 : i32
    %c0_i32 = arith.constant 0 : i32
    %c0_i32_0 = arith.constant 0 : i32
    return %c0_i32, %1 : i32, i32
  }
  func.func @transform_2(%arg0: i32, %arg1: i32) -> (i32, i32) {
    %c0_i32 = arith.constant 0 : i32
    %c0_i32_0 = arith.constant 0 : i32
    %c0_i32_1 = arith.constant 0 : i32
    return %c0_i32, %c0_i32_0 : i32, i32
  }
  func.func @transform_3(%arg0: i32, %arg1: i32) -> (i32, i32) {
    %c0_i32 = arith.constant 0 : i32
    %c0_i32_0 = arith.constant 0 : i32
    %c0_i32_1 = arith.constant 0 : i32
    return %c0_i32, %c0_i32_0 : i32, i32
  }
  func.func @transform_4(%arg0: i32, %arg1: i32) -> (i32, i32) {
    %c0_i32 = arith.constant 0 : i32
    %c0_i32_0 = arith.constant 0 : i32
    %c0_i32_1 = arith.constant 0 : i32
    return %c0_i32, %c0_i32_0 : i32, i32
  }
  func.func @transform_5(%arg0: i32, %arg1: i32) -> (i32, i32) {
    %c0_i32 = arith.constant 0 : i32
    %c0_i32_0 = arith.constant 0 : i32
    %c0_i32_1 = arith.constant 0 : i32
    return %c0_i32, %c0_i32_0 : i32, i32
  }
  func.func @transform_6(%arg0: i32, %arg1: i32) -> (i32, i32) {
    %c1_i32 = arith.constant 1 : i32
    %0 = arith.muli %arg0, %c1_i32 : i32
    %1 = arith.addi %0, %arg1 : i32
    %c0_i32 = arith.constant 0 : i32
    %c0_i32_0 = arith.constant 0 : i32
    return %c0_i32, %1 : i32, i32
  }
  func.func @transform_7(%arg0: i32, %arg1: i32) -> (i32, i32, i32) {
    %c0_i32 = arith.constant 0 : i32
    %c0_i32_0 = arith.constant 0 : i32
    %c0_i32_1 = arith.constant 0 : i32
    return %arg0, %c0_i32, %c0_i32_0 : i32, i32, i32
  }
}

</mosaic_0001>

<llo_original>
// kernel: tpu_custom_call.1
$region0: #{tpu_custom_call.1}
  #allocation0 [shape = 'u32[]', space=smem, size = 0x4, offset = 0x4, fixed_abs, tag = 'smem constant byte address 0x4 - core index']
  #allocation1 [shape = 'u32[144,128]{1,0:T(1,128)}', space=vmem, size = 0x12000, scoped, tag = 'internal scratch']
  %s0 = inlined_call_operand.vmem [shape: bf16[4,512], index: 0, kind: input, shape index: {}]
  %s1 = inlined_call_operand.vmem [shape: s32[2,512], index: 1, kind: input, shape index: {}]
  %s2 = inlined_call_operand.vmem [shape: bf16[32,4], index: 2, kind: input, shape index: {}]
  %s3 = inlined_call_operand.vmem [shape: f32[32,1], index: 3, kind: input, shape index: {}]
  %s4 = inlined_call_operand.vmem [shape: bf16[8,32], index: 4, kind: input, shape index: {}]
  %s5 = inlined_call_operand.vmem [shape: f32[8,1], index: 5, kind: input, shape index: {}]
  %s6 = inlined_call_operand.hbm [shape: f32[8,512], index: 6, kind: output, shape index: {0}]
  %s7 = inlined_call_operand.hbm [shape: f32[2,32,128], index: 7, kind: output, shape index: {1}]
  %8 = xla_tuple %s6, %s7
  %s9 = sld [smem:[#allocation0]]
  $region69: #{tpu_custom_call.1} parent=0
    _
  %s11 = ssub.s32 1, %s9
  %s12 = scalar_select 0, %s11, %s9
  $region1: #{tpu_custom_call.1} parent=0
    #allocation2 [shape = 'u8[16384]{0}', space=vmem, size = 0x4000, scoped, tag = 'output window, operand 0']
    #allocation3 [shape = 's32[2]{0}', space=sflag, size = 0x8, scoped, tag = 'scoped memory for tpu_custom_call.1']
    #allocation4 [shape = 'u8[32768]{0}', space=vmem, size = 0x8000, scoped, tag = 'output window, operand 1']
    #allocation5 [shape = 's32[2]{0}', space=sflag, size = 0x8, scoped, tag = 'scoped memory for tpu_custom_call.1']
    %13 = vsyncpa [#allocation3], 0
    %s14 = scalar_lea.sflag [#allocation3], 1
    %15 = vsyncpa %s14, 0
    %16 = vsyncpa [#allocation5], 0
    %s17 = scalar_lea.sflag [#allocation5], 1
    %18 = vsyncpa %s17, 0
    loop: start=0, step=1, limit=4
    $region2: #{tpu_custom_call.1} parent=1 // loop_pre_header
      _
    $region3: #{tpu_custom_call.1} parent=1 // loop_header
      %s20 = sphi 0, %s24
      %p21 = scmp.ge.s32.totalorder %s20, 4
      %s27 = sphi 0, %s39
      %s28 = sphi 0, %s35
      %s29 = sphi 0, %s27
      %s30 = sphi 0, %s28
      %s31 = sphi 0, %s29
      %s32 = sphi 0, %s30
      %s44 = sphi 0, %s46
      %s47 = sphi 0, %s44
      %s48 = sphi 0, %s47
      %s64 = sphi 0, %s48
      %s72 = sphi 0, %s74
      %s75 = sphi 0, %s72
      %s76 = sphi 0, %s75
      %s92 = sphi 0, %s76
      %s96 = sphi 0, %s96
      %s98 = sphi 0, %s96
      %s99 = sphi 0, %s98
      %s113 = sphi 0, %s99
      %s117 = sphi 0, %s117
      %s119 = sphi 0, %s117
      %s120 = sphi 0, %s119
      %s134 = sphi 0, %s120
      %s138 = sphi 0, %s138
      %s140 = sphi 0, %s138
      %s141 = sphi 0, %s140
      %s155 = sphi 0, %s141
      %s159 = sphi 0, %s159
      %s161 = sphi 0, %s159
      %s162 = sphi 0, %s161
      %s176 = sphi 0, %s162
      %s184 = sphi 0, %s186
      %s187 = sphi 0, %s184
      %s188 = sphi 0, %s187
      %s204 = sphi 0, %s188
      %s210 = sphi 0, %s212
      %s213 = sphi 0, %s210
      %s214 = sphi 0, %s213
      %s230 = sphi 0, %s214
    $region4: #{tpu_custom_call.1} parent=1 // loop_header_branch
      %23 = sbr.rel (%p21) target = $region8
    $region5: #{tpu_custom_call.1} parent=1 // loop_body
      %s25 = ssub.s32 %s20, 1
      %s26 = ssub.s32 %s20, 2
      %s33 = sadd.s32 1, %s28
      %p34 = scmp.ge.s32.totalorder %s33, 1
      %s35 = scalar_select %p34, 0, %s33
      %s36 = sadd.s32 1, %s27
      %s37 = scalar_select %p34, %s36, %s27
      %p38 = scmp.ge.s32.totalorder %s37, 2
      %s39 = scalar_select %p38, 0, %s37
      %s40 = sadd.s32 %s27, %s28
      %s41 = sadd.s32 %s39, %s35
      %s42 = ssub.s32 %s40, %s41
      %p43 = scmp.eq.s32.totalorder %s42, 0
      %s45 = sadd.s32 %s44, 1
      %s46 = scalar_select %p43, %s44, %s45
      %p49 = pneg %p43
      %p50 = scmp.eq.s32.totalorder %s20, 1
      %p51 = por %p49, %p50
      %p52 = scmp.ne.s32.totalorder %s44, %s47
      %p53 = scmp.eq.s32.totalorder %s20, 0
      %p54 = por %p52, %p53
      %p55 = scmp.ne.s32.totalorder %s44, %s47
      %p56 = scmp.eq.s32.totalorder %s25, 1
      %p57 = por %p55, %p56
      %p58 = scmp.ne.s32.totalorder %s47, %s48
      %p59 = scmp.eq.s32.totalorder %s25, 0
      %p60 = por %p58, %p59
      %p61 = scmp.ne.s32.totalorder %s47, %s48
      %p62 = scmp.eq.s32.totalorder %s26, 1
      %p63 = por %p61, %p62
      %p65 = scmp.ne.s32.totalorder %s48, %s64
      %p66 = scmp.eq.s32.totalorder %s26, 0
      %p67 = por %p65, %p66
      %s68 = sadd.s32 %s27, %s28
      %s69 = sadd.s32 %s39, %s35
      %s70 = ssub.s32 %s68, %s69
      %p71 = scmp.eq.s32.totalorder %s70, 0
      %s73 = sadd.s32 %s72, 1
      %s74 = scalar_select %p71, %s72, %s73
      %p77 = pneg %p71
      %p78 = scmp.eq.s32.totalorder %s20, 1
      %p79 = por %p77, %p78
      %p80 = scmp.ne.s32.totalorder %s72, %s75
      %p81 = scmp.eq.s32.totalorder %s20, 0
      %p82 = por %p80, %p81
      %p83 = scmp.ne.s32.totalorder %s72, %s75
      %p84 = scmp.eq.s32.totalorder %s25, 1
      %p85 = por %p83, %p84
      %p86 = scmp.ne.s32.totalorder %s75, %s76
      %p87 = scmp.eq.s32.totalorder %s25, 0
      %p88 = por %p86, %p87
      %p89 = scmp.ne.s32.totalorder %s75, %s76
      %p90 = scmp.eq.s32.totalorder %s26, 1
      %p91 = por %p89, %p90
      %p93 = scmp.ne.s32.totalorder %s76, %s92
      %p94 = scmp.eq.s32.totalorder %s26, 0
      %p95 = por %p93, %p94
      %s97 = sadd.s32 %s96, 1
      %p100 = scmp.eq.s32.totalorder %s20, 1
      %p101 = scmp.ne.s32.totalorder %s96, %s98
      %p102 = scmp.eq.s32.totalorder %s20, 0
      %p103 = por %p101, %p102
      %p104 = scmp.ne.s32.totalorder %s96, %s98
      %p105 = scmp.eq.s32.totalorder %s25, 1
      %p106 = por %p104, %p105
      %p107 = scmp.ne.s32.totalorder %s98, %s99
      %p108 = scmp.eq.s32.totalorder %s25, 0
      %p109 = por %p107, %p108
      %p110 = scmp.ne.s32.totalorder %s98, %s99
      %p111 = scmp.eq.s32.totalorder %s26, 1
      %p112 = por %p110, %p111
      %p114 = scmp.ne.s32.totalorder %s99, %s113
      %p115 = scmp.eq.s32.totalorder %s26, 0
      %p116 = por %p114, %p115
      %s118 = sadd.s32 %s117, 1
      %p121 = scmp.eq.s32.totalorder %s20, 1
      %p122 = scmp.ne.s32.totalorder %s117, %s119
      %p123 = scmp.eq.s32.totalorder %s20, 0
      %p124 = por %p122, %p123
      %p125 = scmp.ne.s32.totalorder %s117, %s119
      %p126 = scmp.eq.s32.totalorder %s25, 1
      %p127 = por %p125, %p126
      %p128 = scmp.ne.s32.totalorder %s119, %s120
      %p129 = scmp.eq.s32.totalorder %s25, 0
      %p130 = por %p128, %p129
      %p131 = scmp.ne.s32.totalorder %s119, %s120
      %p132 = scmp.eq.s32.totalorder %s26, 1
      %p133 = por %p131, %p132
      %p135 = scmp.ne.s32.totalorder %s120, %s134
      %p136 = scmp.eq.s32.totalorder %s26, 0
      %p137 = por %p135, %p136
      %s139 = sadd.s32 %s138, 1
      %p142 = scmp.eq.s32.totalorder %s20, 1
      %p143 = scmp.ne.s32.totalorder %s138, %s140
      %p144 = scmp.eq.s32.totalorder %s20, 0
      %p145 = por %p143, %p144
      %p146 = scmp.ne.s32.totalorder %s138, %s140
      %p147 = scmp.eq.s32.totalorder %s25, 1
      %p148 = por %p146, %p147
      %p149 = scmp.ne.s32.totalorder %s140, %s141
      %p150 = scmp.eq.s32.totalorder %s25, 0
      %p151 = por %p149, %p150
      %p152 = scmp.ne.s32.totalorder %s140, %s141
      %p153 = scmp.eq.s32.totalorder %s26, 1
      %p154 = por %p152, %p153
      %p156 = scmp.ne.s32.totalorder %s141, %s155
      %p157 = scmp.eq.s32.totalorder %s26, 0
      %p158 = por %p156, %p157
      %s160 = sadd.s32 %s159, 1
      %p163 = scmp.eq.s32.totalorder %s20, 1
      %p164 = scmp.ne.s32.totalorder %s159, %s161
      %p165 = scmp.eq.s32.totalorder %s20, 0
      %p166 = por %p164, %p165
      %p167 = scmp.ne.s32.totalorder %s159, %s161
      %p168 = scmp.eq.s32.totalorder %s25, 1
      %p169 = por %p167, %p168
      %p170 = scmp.ne.s32.totalorder %s161, %s162
      %p171 = scmp.eq.s32.totalorder %s25, 0
      %p172 = por %p170, %p171
      %p173 = scmp.ne.s32.totalorder %s161, %s162
      %p174 = scmp.eq.s32.totalorder %s26, 1
      %p175 = por %p173, %p174
      %p177 = scmp.ne.s32.totalorder %s162, %s176
      %p178 = scmp.eq.s32.totalorder %s26, 0
      %p179 = por %p177, %p178
      %s180 = sadd.s32 %s27, %s28
      %s181 = sadd.s32 %s39, %s35
      %s182 = ssub.s32 %s180, %s181
      %p183 = scmp.eq.s32.totalorder %s182, 0
      %s185 = sadd.s32 %s184, 1
      %s186 = scalar_select %p183, %s184, %s185
      %p189 = pneg %p183
      %p190 = scmp.eq.s32.totalorder %s20, 1
      %p191 = por %p189, %p190
      %p192 = scmp.ne.s32.totalorder %s184, %s187
      %p193 = scmp.eq.s32.totalorder %s20, 0
      %p194 = por %p192, %p193
      %p195 = scmp.ne.s32.totalorder %s184, %s187
      %p196 = scmp.eq.s32.totalorder %s25, 1
      %p197 = por %p195, %p196
      %p198 = scmp.ne.s32.totalorder %s187, %s188
      %p199 = scmp.eq.s32.totalorder %s25, 0
      %p200 = por %p198, %p199
      %p201 = scmp.ne.s32.totalorder %s187, %s188
      %p202 = scmp.eq.s32.totalorder %s26, 1
      %p203 = por %p201, %p202
      %p205 = scmp.ne.s32.totalorder %s188, %s204
      %p206 = scmp.eq.s32.totalorder %s26, 0
      %p207 = por %p205, %p206
      %s208 = ssub.s32 %s27, %s39
      %p209 = scmp.eq.s32.totalorder %s208, 0
      %s211 = sadd.s32 %s210, 1
      %s212 = scalar_select %p209, %s210, %s211
      %p215 = pneg %p209
      %p216 = scmp.eq.s32.totalorder %s20, 1
      %p217 = por %p215, %p216
      %p218 = scmp.ne.s32.totalorder %s210, %s213
      %p219 = scmp.eq.s32.totalorder %s20, 0
      %p220 = por %p218, %p219
      %p221 = scmp.ne.s32.totalorder %s210, %s213
      %p222 = scmp.eq.s32.totalorder %s25, 1
      %p223 = por %p221, %p222
      %p224 = scmp.ne.s32.totalorder %s213, %s214
      %p225 = scmp.eq.s32.totalorder %s25, 0
      %p226 = por %p224, %p225
      %p227 = scmp.ne.s32.totalorder %s213, %s214
      %p228 = scmp.eq.s32.totalorder %s26, 1
      %p229 = por %p227, %p228
      %p231 = scmp.ne.s32.totalorder %s214, %s230
      %p232 = scmp.eq.s32.totalorder %s26, 0
      %p233 = por %p231, %p232
      %p234 = scmp.le.s32.totalorder 1, %s20
      %p235 = scmp.lt.s32.totalorder %s20, 3
      %p236 = pnand %p234, %p235
      %p237 = pneg %p236
      // Predicated region
      $region9: #{tpu_custom_call.1} parent=5 // pred_check
        _
      $region10: #{tpu_custom_call.1} parent=5 // pred_check_branch
        %239 = sbr.rel (%p236) target = $region12
      $region11: #{tpu_custom_call.1} parent=5 // pred_region
        %s240 = ssub.s32 %s20, 1
        // Predicated region
        $region13: #{tpu_custom_call.1} parent=11 // pred_check
          %p241 = pneg %p109
        $region14: #{tpu_custom_call.1} parent=11 // pred_check_branch
          %243 = sbr.rel (%p241) target = $region16
        $region15: #{tpu_custom_call.1} parent=11 // pred_region
          _
        $region16: #{tpu_custom_call.1} parent=11 // pred_fallthru
          _
        // Predicated region
        $region17: #{tpu_custom_call.1} parent=11 // pred_check
          %p244 = pneg %p130
        $region18: #{tpu_custom_call.1} parent=11 // pred_check_branch
          %246 = sbr.rel (%p244) target = $region20
        $region19: #{tpu_custom_call.1} parent=11 // pred_region
          _
        $region20: #{tpu_custom_call.1} parent=11 // pred_fallthru
          _
        // Predicated region
        $region21: #{tpu_custom_call.1} parent=11 // pred_check
          %p247 = pneg %p151
        $region22: #{tpu_custom_call.1} parent=11 // pred_check_branch
          %249 = sbr.rel (%p247) target = $region24
        $region23: #{tpu_custom_call.1} parent=11 // pred_region
          _
        $region24: #{tpu_custom_call.1} parent=11 // pred_fallthru
          _
        // Predicated region
        $region25: #{tpu_custom_call.1} parent=11 // pred_check
          %p250 = pneg %p172
        $region26: #{tpu_custom_call.1} parent=11 // pred_check_branch
          %252 = sbr.rel (%p250) target = $region28
        $region27: #{tpu_custom_call.1} parent=11 // pred_region
          _
        $region28: #{tpu_custom_call.1} parent=11 // pred_fallthru
          _
      $region12: #{tpu_custom_call.1} parent=5 // pred_fallthru
        _
      %p253 = scmp.lt.s32.totalorder %s20, 2
      // Predicated region
      $region29: #{tpu_custom_call.1} parent=5 // pred_check
        %p254 = pneg %p253
      $region30: #{tpu_custom_call.1} parent=5 // pred_check_branch
        %256 = sbr.rel (%p254) target = $region32
      $region31: #{tpu_custom_call.1} parent=5 // pred_region
        // Predicated region
        $region33: #{tpu_custom_call.1} parent=31 // pred_check
          %p257 = pneg %p54
        $region34: #{tpu_custom_call.1} parent=31 // pred_check_branch
          %259 = sbr.rel (%p257) target = $region36
        $region35: #{tpu_custom_call.1} parent=31 // pred_region
          %s260 = sadd.s32 %s27, %s28
          %s261 = smul.u32 2, %s260
          %p262 = scmp.lt.s32.totalorder %s261, 3
          %s263 = scalar_select %p262, %s261, 3
          %s264 = smul.addr %s263, 2
          %s265 = scalar_lea.vmem %s0, %s264
          %s266 = sadd.s32 %s27, %s28
          %s267 = smul.u32 2, %s266
        $region36: #{tpu_custom_call.1} parent=31 // pred_fallthru
          _
        // Predicated region
        $region37: #{tpu_custom_call.1} parent=31 // pred_check
          %p268 = pneg %p82
        $region38: #{tpu_custom_call.1} parent=31 // pred_check_branch
          %270 = sbr.rel (%p268) target = $region40
        $region39: #{tpu_custom_call.1} parent=31 // pred_region
          %s271 = sadd.s32 %s27, %s28
          %s272 = smul.u32 2, %s271
          %p273 = scmp.lt.s32.totalorder %s272, 3
          %s274 = scalar_select %p273, %s272, 3
          %s275 = smul.addr %s274, 2
          %s276 = scalar_lea.vmem %s1, %s275
          %s277 = sadd.s32 %s27, %s28
          %s278 = smul.u32 2, %s277
        $region40: #{tpu_custom_call.1} parent=31 // pred_fallthru
          _
      $region32: #{tpu_custom_call.1} parent=5 // pred_fallthru
        _
      %p279 = scmp.le.s32.totalorder 1, %s20
      %p280 = scmp.lt.s32.totalorder %s20, 3
      %p281 = pnand %p279, %p280
      %p282 = pneg %p281
      // Predicated region
      $region41: #{tpu_custom_call.1} parent=5 // pred_check
        _
      $region42: #{tpu_custom_call.1} parent=5 // pred_check_branch
        %284 = sbr.rel (%p281) target = $region44
      $region43: #{tpu_custom_call.1} parent=5 // pred_region
        %s285 = ssub.s32 %s20, 1
        %s286 = sadd.s32 %s29, %s30
        %s287 = smul.u32 2, %s286
        %p288 = scmp.lt.s32.totalorder %s287, 3
        %s289 = scalar_select %p288, %s287, 3
        %s290 = smul.addr %s289, 2
        %s291 = scalar_lea.vmem %s0, %s290
        %p292 = pneg %p60
        %p293 = pneg %p57
        %s294 = sadd.s32 %s29, %s30
        %s295 = smul.u32 2, %s294
        %p296 = scmp.lt.s32.totalorder %s295, 3
        %s297 = scalar_select %p296, %s295, 3
        %s298 = smul.addr %s297, 2
        %s299 = scalar_lea.vmem %s1, %s298
        %p300 = pneg %p88
        %p301 = pneg %p85
        %p302 = pneg %p109
        %p303 = pneg %p106
        %p304 = pneg %p130
        %p305 = pneg %p127
        %p306 = pneg %p151
        %p307 = pneg %p148
        %p308 = pneg %p172
        %p309 = pneg %p169
        %p310 = pneg %p200
        %p311 = pneg %p197
        %s312 = sand.u32 %s187, 1
        %s313 = scalar_lea.sflag [#allocation3], %s312
        %s314 = sand.u32 %s187, 1
        %s315 = smul.addr %s314, 16
        %s316 = scalar_lea.vmem [#allocation2], %s315
        %p317 = pneg %p226
        %p318 = pneg %p223
        %s319 = sand.u32 %s213, 1
        %s320 = scalar_lea.sflag [#allocation5], %s319
        %s321 = sand.u32 %s213, 1
        %s322 = smul.addr %s321, 32
        %s323 = scalar_lea.vmem [#allocation4], %s322
        %s324 = sadd.s32 %s29, %s30
        %s325 = smul.u32 2, %s324
        %p326 = scmp.lt.s32.totalorder %s325, 3
        %s327 = scalar_select %p326, %s325, 3
        %s328 = smul.addr %s327, 2
        %s329 = scalar_lea.vmem %s0, %s328
        %s330 = sadd.s32 %s29, %s30
        %s331 = smul.u32 2, %s330
        %s332 = sadd.s32 %s29, %s30
        %s333 = smul.u32 2, %s332
        %p334 = scmp.lt.s32.totalorder %s333, 3
        %s335 = scalar_select %p334, %s333, 3
        %s336 = smul.addr %s335, 2
        %s337 = scalar_lea.vmem %s1, %s336
        %s338 = sadd.s32 %s29, %s30
        %s339 = smul.u32 2, %s338
        %s340 = sadd.s32 %s29, %s30
        %s341 = smul.u32 2, %s340
        %p344 = scmp.eq.s32.totalorder %s30, 0
        // Predicated region
        $region45: #{tpu_custom_call.1} parent=43 // pred_check
          %p345 = pneg %p344
        $region46: #{tpu_custom_call.1} parent=43 // pred_check_branch
          %347 = sbr.rel (%p345) target = $region48
        $region47: #{tpu_custom_call.1} parent=43 // pred_region
          %348 = vst [vmem:[%s323] sm:$0xff] 0.0
          %349 = vst [vmem:[%s323 + $0x8] sm:$0xff] 0.0
          %350 = vst [vmem:[%s323 + $0x10] sm:$0xff] 0.0
          %351 = vst [vmem:[%s323 + $0x18] sm:$0xff] 0.0
        $region48: #{tpu_custom_call.1} parent=43 // pred_fallthru
          _
        %v352 = vld [vmem:[%s329] sm:$0xf]
        %v353 = vld [vmem:[%s2] sm:$0xf]
        %v354 = vld [vmem:[%s2 + $0x4] sm:$0xf]
        %v355 = vld [vmem:[%s2 + $0x8] sm:$0xf]
        %v356 = vld [vmem:[%s2 + $0xc] sm:$0xf]
        %v357 = vld [vmem:[%s3] sm:$0xff]
        %v358 = vld [vmem:[%s3 + $0x8] sm:$0xff]
        %v359 = vld [vmem:[%s3 + $0x10] sm:$0xff]
        %v360 = vld [vmem:[%s3 + $0x18] sm:$0xff]
        %362 = vset.pattern.permute.xlu0 0
        %363 = vperm.xlu0 %362, %v357
        %v364 = vpop.permute.xlu0 %363
        %367 = vset.pattern.permute.xlu0 0
        %368 = vperm.xlu0 %367, %v358
        %v369 = vpop.permute.xlu0 %368
        %372 = vset.pattern.permute.xlu0 0
        %373 = vperm.xlu0 %372, %v359
        %v374 = vpop.permute.xlu0 %373
        %377 = vset.pattern.permute.xlu0 0
        %378 = vperm.xlu0 %377, %v360
        %v379 = vpop.permute.xlu0 %378
        %v385 = vunpack.c.l.b16 %v353
        %v386 = vunpack.c.l.b16 %v354
        %v387 = vunpack.c.l.b16 %v355
        %v388 = vunpack.c.l.b16 %v356
        %v389 = vpack.c.b16 %v386, %v385
        %v390 = vpack.c.b16 %v388, %v387
        %v393 = vunpack.c.l.s4 1983009808
        %v394 = vunpack.c.0.s8 %v393
        %v395 = vlaneseq
        %v396 = vshrl.u32 %v395, 7
        %v397 = vsub.s32 %v394, %v396
        %v398 = vrot.slane %v352, %v397
        %v399 = vcombine.high %v398, %v398
        %vm400 = vcmask 31744
        %v402 = vsel %vm400, %v389, 0
        %v405 = vsel %vm400, %v390, 0
        %vm407 = vcmask 1041408
        %v409 = vsel %vm407, %v398, 0
        %v412 = vsel %vm407, %v399, 0
        %414 = vmatprep.subr.bf16.mxu0 %v412
        %415 = vmatpush1.bf16.msra.mxu0 %v409
        %416 = vmatprep.subr.bf16.mxu0 0
        %417 = vmatpush1.bf16.msra.mxu0 0
        %418 = vmatprep.subr.bf16.mxu0 0
        %419 = vmatpush1.bf16.msra.mxu0 0
        %420 = vmatprep.subr.bf16.mxu0 0
        %421 = vmatpush1.bf16.msra.mxu0 0
        %422 = vmatprep.subr.bf16.mxu0 0
        %423 = vmatpush1.bf16.msra.mxu0 0
        %424 = vmatprep.subr.bf16.mxu0 0
        %425 = vmatpush1.bf16.msra.mxu0 0
        %426 = vmatprep.subr.bf16.mxu0 0
        %427 = vmatpush1.bf16.msra.mxu0 0
        %428 = vmatprep.subr.bf16.mxu0 0
        %429 = vmatpush1.bf16.msra.mxu0 0
        %430 = vmatprep.subr.bf16.mxu0 0
        %431 = vmatpush1.bf16.msra.mxu0 0
        %432 = vmatprep.subr.bf16.mxu0 0
        %433 = vmatpush1.bf16.msra.mxu0 0
        %434 = vmatprep.subr.bf16.mxu0 0
        %435 = vmatpush1.bf16.msra.mxu0 0
        %436 = vmatprep.subr.bf16.mxu0 0
        %437 = vmatpush1.bf16.msra.mxu0 0
        %438 = vmatprep.subr.bf16.mxu0 0
        %439 = vmatpush1.bf16.msra.mxu0 0
        %440 = vmatprep.subr.bf16.mxu0 0
        %441 = vmatpush1.bf16.msra.mxu0 0
        %442 = vmatprep.subr.bf16.mxu0 0
        %443 = vmatpush1.bf16.msra.mxu0 0
        %444 = vmatprep.subr.bf16.mxu0 0
        %445 = vmatpush1.bf16.msra.mxu0 0
        %446 = vmatprep.mubr.bf16.mxu0 0
        %447 = vmatmul.mubr.bf16.gmra.mrb[0].mxu0 %v402
        %v448 = vpop.f32.mrb[0].mxu0
        %v449 = vadd.f32 %v364, %v448
        %v450 = vpop.f32.mrb[0].mxu0
        %v451 = vadd.f32 %v364, %v450
        %v452 = vpop.f32.mrb[0].mxu0
        %v453 = vadd.f32 %v369, %v452
        %v454 = vpop.f32.mrb[0].mxu0
        %v455 = vadd.f32 %v369, %v454
        %456 = vmatprep.mubr.bf16.mxu0 0
        %457 = vmatmul.mubr.bf16.gmra.mrb[0].mxu0 %v405
        %v458 = vpop.f32.mrb[0].mxu0
        %v459 = vadd.f32 %v374, %v458
        %v460 = vpop.f32.mrb[0].mxu0
        %v461 = vadd.f32 %v374, %v460
        %v462 = vpop.f32.mrb[0].mxu0
        %v463 = vadd.f32 %v379, %v462
        %v464 = vpop.f32.mrb[0].mxu0
        %v465 = vadd.f32 %v379, %v464
        %466 = vdwg.mxu0
        %v467 = vmax.f32 %v449, 0.0
        %v468 = vmax.f32 %v451, 0.0
        %v469 = vmax.f32 %v453, 0.0
        %v470 = vmax.f32 %v455, 0.0
        %v471 = vmax.f32 %v459, 0.0
        %v472 = vmax.f32 %v461, 0.0
        %v473 = vmax.f32 %v463, 0.0
        %v474 = vmax.f32 %v465, 0.0
        %v475 = vpack.c.bf16 %v469, %v467
        %v476 = vpack.c.bf16 %v470, %v468
        %v477 = vpack.c.bf16 %v473, %v471
        %v478 = vpack.c.bf16 %v474, %v472
        %v479 = vld [vmem:[%s4] sm:$0xf]
        %v480 = vld [vmem:[%s5] sm:$0xff]
        %482 = vset.pattern.permute.xlu0 0
        %483 = vperm.xlu0 %482, %v480
        %v484 = vpop.permute.xlu0 %483
        %vm486 = vcmask 261120
        %v488 = vsel %vm486, %v479, 0
        %490 = vmatprep.subr.bf16.mxu0 %v476
        %491 = vmatpush1.bf16.msra.mxu0 %v475
        %492 = vmatprep.subr.bf16.mxu0 %v478
        %493 = vmatpush1.bf16.msra.mxu0 %v477
        %494 = vmatprep.subr.bf16.mxu0 0
        %495 = vmatpush1.bf16.msra.mxu0 0
        %496 = vmatprep.subr.bf16.mxu0 0
        %497 = vmatpush1.bf16.msra.mxu0 0
        %498 = vmatprep.subr.bf16.mxu0 0
        %499 = vmatpush1.bf16.msra.mxu0 0
        %500 = vmatprep.subr.bf16.mxu0 0
        %501 = vmatpush1.bf16.msra.mxu0 0
        %502 = vmatprep.subr.bf16.mxu0 0
        %503 = vmatpush1.bf16.msra.mxu0 0
        %504 = vmatprep.subr.bf16.mxu0 0
        %505 = vmatpush1.bf16.msra.mxu0 0
        %506 = vmatprep.subr.bf16.mxu0 0
        %507 = vmatpush1.bf16.msra.mxu0 0
        %508 = vmatprep.subr.bf16.mxu0 0
        %509 = vmatpush1.bf16.msra.mxu0 0
        %510 = vmatprep.subr.bf16.mxu0 0
        %511 = vmatpush1.bf16.msra.mxu0 0
        %512 = vmatprep.subr.bf16.mxu0 0
        %513 = vmatpush1.bf16.msra.mxu0 0
        %514 = vmatprep.subr.bf16.mxu0 0
        %515 = vmatpush1.bf16.msra.mxu0 0
        %516 = vmatprep.subr.bf16.mxu0 0
        %517 = vmatpush1.bf16.msra.mxu0 0
        %518 = vmatprep.subr.bf16.mxu0 0
        %519 = vmatpush1.bf16.msra.mxu0 0
        %520 = vmatprep.subr.bf16.mxu0 0
        %521 = vmatpush1.bf16.msra.mxu0 0
        %522 = vmatprep.mubr.bf16.mxu0 0
        %523 = vmatmul.mubr.bf16.gmra.mrb[0].mxu0 %v488
        %v524 = vpop.f32.mrb[0].mxu0
        %v525 = vadd.f32 %v484, %v524
        %v526 = vpop.f32.mrb[0].mxu0
        %v527 = vadd.f32 %v484, %v526
        %v528 = vpop.f32.mrb[0].mxu0
        %v529 = vpop.f32.mrb[0].mxu0
        %530 = vdwg.mxu0
        %531 = vst [vmem:[%s316] sm:$0xff] %v525
        %532 = vst [vmem:[%s316 + $0x8] sm:$0xff] %v527
        %v533 = vld [vmem:[%s337] sm:$0xf]
        %v534 = vlaneseq
        %v535 = vshrl.u32 %v534, 7
        %v536 = vadd.s32 %v535, 8
        %v537 = vadd.s32 %v535, 16
        %v538 = vadd.s32 %v535, 24
        %v539 = vlaneseq
        %v540 = vshrl.u32 %v539, 7
        %v541 = vsub.s32 0, %v540
        %v542 = vrot.slane %v533, %v541
        %v543 = vlaneseq
        %v544 = vshrl.u32 %v543, 7
        %v545 = vsub.s32 2, %v544
        %v546 = vrot.slane %v533, %v545
        %v547 = vlaneseq
        %v548 = vshrl.u32 %v547, 7
        %v549 = vsub.s32 0, %v548
        %v550 = vrot.slane %v542, %v549
        %v551 = vlaneseq
        %v552 = vshrl.u32 %v551, 7
        %v553 = vsub.s32 0, %v552
        %v554 = vrot.slane %v546, %v553
        %vm555 = vcmp.eq.s32.totalorder %v550, %v535
        %vm556 = vcmp.eq.s32.totalorder %v554, %v535
        %vm557 = vcmp.eq.s32.totalorder %v550, %v536
        %vm558 = vcmp.eq.s32.totalorder %v554, %v536
        %vm559 = vcmp.eq.s32.totalorder %v550, %v537
        %vm560 = vcmp.eq.s32.totalorder %v554, %v537
        %vm561 = vcmp.eq.s32.totalorder %v550, %v538
        %vm562 = vcmp.eq.s32.totalorder %v554, %v538
        %v563 = vsel %vm555, 1, 0
        %v564 = vsel %vm556, 1, 0
        %v565 = vsel %vm557, 1, 0
        %v566 = vsel %vm558, 1, 0
        %v567 = vsel %vm559, 1, 0
        %v568 = vsel %vm560, 1, 0
        %v569 = vsel %vm561, 1, 0
        %v570 = vsel %vm562, 1, 0
        %v571 = vcvt.s32.f32 %v563
        %v572 = vcvt.s32.f32 %v564
        %v573 = vcvt.s32.f32 %v565
        %v574 = vcvt.s32.f32 %v566
        %v575 = vcvt.s32.f32 %v567
        %v576 = vcvt.s32.f32 %v568
        %v577 = vcvt.s32.f32 %v569
        %v578 = vcvt.s32.f32 %v570
        %v579 = vpack.c.bf16 %v573, %v571
        %v580 = vpack.c.bf16 %v574, %v572
        %v581 = vpack.c.bf16 %v577, %v575
        %v582 = vpack.c.bf16 %v578, %v576
        %v583 = vlaneseq
        %v584 = vshrl.u32 %v583, 7
        %v585 = vsub.s32 1, %v584
        %v586 = vrot.slane %v533, %v585
        %v587 = vlaneseq
        %v588 = vshrl.u32 %v587, 7
        %v589 = vsub.s32 3, %v588
        %v590 = vrot.slane %v533, %v589
        %v591 = vlaneseq
        %v592 = vshrl.u32 %v591, 7
        %v593 = vsub.s32 1, %v592
        %v594 = vrot.slane %v586, %v593
        %v595 = vlaneseq
        %v596 = vshrl.u32 %v595, 7
        %v597 = vsub.s32 1, %v596
        %v598 = vrot.slane %v590, %v597
        %vm599 = vcmp.eq.s32.totalorder %v594, %v535
        %vm600 = vcmp.eq.s32.totalorder %v598, %v535
        %v601 = vsel %vm599, 1, 0
        %v602 = vsel %vm600, 1, 0
        %v603 = vcvt.s32.f32 %v601
        %v604 = vcvt.s32.f32 %v602
        %v605 = vpack.c.bf16 %v603, %v603
        %v606 = vpack.c.bf16 %v604, %v604
        %v608 = vshrl.u32 %v605, 16
        %v610 = vrot.slane %v608, 7
        %v611 = vshll.u32 %v605, 16
        %v613 = vor.u32 %v610, %v611
        %v615 = vshrl.u32 %v606, 16
        %v617 = vrot.slane %v615, 7
        %v618 = vshll.u32 %v606, 16
        %v620 = vor.u32 %v617, %v618
        %vm623 = vcmask 1040384
        %vm624 = vsmask.f32 256
        %vm625 = vmand %vm623, %vm624
        %v626 = vsel %vm625, 1065369472, %v613
        %v627 = vsel %vm625, 1065369472, %v620
        %vm628 = vcmask 1044480
        %vm629 = vsmask.f32 4352
        %vm630 = vmand %vm628, %vm629
        %v631 = vsel %vm630, %v626, 0
        %v632 = vsel %vm630, %v627, 0
        %633 = vmatprep.subr.bf16.mxu0 %v476
        %634 = vmatpush1.bf16.xpose.msra.mxu0 %v475
        %635 = vmatprep.subr.bf16.mxu0 %v478
        %636 = vmatpush1.bf16.xpose.msra.mxu0 %v477
        %637 = vmatprep.subr.bf16.mxu0 %v632
        %638 = vmatpush1.bf16.xpose.msra.mxu0 %v631
        %639 = vmatprep.subr.bf16.mxu0 0
        %640 = vmatpush1.bf16.xpose.msra.mxu0 0
        %641 = vmatprep.subr.bf16.mxu0 0
        %642 = vmatpush1.bf16.xpose.msra.mxu0 0
        %643 = vmatprep.subr.bf16.mxu0 0
        %644 = vmatpush1.bf16.xpose.msra.mxu0 0
        %645 = vmatprep.subr.bf16.mxu0 0
        %646 = vmatpush1.bf16.xpose.msra.mxu0 0
        %647 = vmatprep.subr.bf16.mxu0 0
        %648 = vmatpush1.bf16.xpose.msra.mxu0 0
        %649 = vmatprep.subr.bf16.mxu0 0
        %650 = vmatpush1.bf16.xpose.msra.mxu0 0
        %651 = vmatprep.subr.bf16.mxu0 0
        %652 = vmatpush1.bf16.xpose.msra.mxu0 0
        %653 = vmatprep.subr.bf16.mxu0 0
        %654 = vmatpush1.bf16.xpose.msra.mxu0 0
        %655 = vmatprep.subr.bf16.mxu0 0
        %656 = vmatpush1.bf16.xpose.msra.mxu0 0
        %657 = vmatprep.subr.bf16.mxu0 0
        %658 = vmatpush1.bf16.xpose.msra.mxu0 0
        %659 = vmatprep.subr.bf16.mxu0 0
        %660 = vmatpush1.bf16.xpose.msra.mxu0 0
        %661 = vmatprep.subr.bf16.mxu0 0
        %662 = vmatpush1.bf16.xpose.msra.mxu0 0
        %663 = vmatprep.subr.bf16.mxu0 0
        %664 = vmatpush1.bf16.xpose.msra.mxu0 0
        %665 = vmatprep.mubr.bf16.mxu0 %v580
        %666 = vmatmul.mubr.bf16.gmra.mrb[0].mxu0 %v579
        %v667 = vpop.f32.mrb[0].mxu0
        %v668 = vadd.f32 0.0, %v667
        %v669 = vpop.f32.mrb[0].mxu0
        %v670 = vpop.f32.mrb[0].mxu0
        %v671 = vadd.f32 0.0, %v670
        %v672 = vpop.f32.mrb[0].mxu0
        %673 = vmatprep.mubr.bf16.mxu0 %v582
        %674 = vmatmul.mubr.bf16.gmra.mrb[0].mxu0 %v581
        %v675 = vpop.f32.mrb[0].mxu0
        %v676 = vadd.f32 0.0, %v675
        %v677 = vpop.f32.mrb[0].mxu0
        %v678 = vpop.f32.mrb[0].mxu0
        %v679 = vadd.f32 0.0, %v678
        %v680 = vpop.f32.mrb[0].mxu0
        %681 = vdwg.mxu0
        %v682 = vld [vmem:[%s323] sm:$0xff]
        %v683 = vld [vmem:[%s323 + $0x8] sm:$0xff]
        %v684 = vld [vmem:[%s323 + $0x10] sm:$0xff]
        %v685 = vld [vmem:[%s323 + $0x18] sm:$0xff]
        %v686 = vadd.f32 %v682, %v668
        %v687 = vadd.f32 %v683, %v671
        %v688 = vadd.f32 %v684, %v676
        %v689 = vadd.f32 %v685, %v679
        %690 = vst [vmem:[%s323] sm:$0xff] %v686
        %691 = vst [vmem:[%s323 + $0x8] sm:$0xff] %v687
        %692 = vst [vmem:[%s323 + $0x10] sm:$0xff] %v688
        %693 = vst [vmem:[%s323 + $0x18] sm:$0xff] %v689
        %s694 = sand.u32 %s187, 1
        %s695 = scalar_lea.sflag [#allocation3], %s694
        %s696 = sand.u32 %s187, 1
        %s697 = smul.addr %s696, 16
        %s698 = scalar_lea.vmem [#allocation2], %s697
        %s699 = sand.u32 %s213, 1
        %s700 = scalar_lea.sflag [#allocation5], %s699
        %s701 = sand.u32 %s213, 1
        %s702 = smul.addr %s701, 32
        %s703 = scalar_lea.vmem [#allocation4], %s702
        // Predicated region
        $region49: #{tpu_custom_call.1} parent=43 // pred_check
          %p704 = pneg %p197
        $region50: #{tpu_custom_call.1} parent=43 // pred_check_branch
          %706 = sbr.rel (%p704) target = $region52
        $region51: #{tpu_custom_call.1} parent=43 // pred_region
          %s707 = sadd.s32 %s29, %s30
          %s708 = smul.u32 2, %s707
          %s710 = ssub.s32 256, 256
          %711 = vsyncadd %s695, %s710
          %s712 = smul.addr %s708, 128
          %s713 = scalar_lea.hbm %s6, %s712
          %s715 = sshll.u32 %s698, 4
          %s716 = int_to_ptr.vmem [resolvable:$true] %s715
          %718 = dma.vmem_to_hbm [thread:$0]  %s716, 256, %s713, %s695
        $region52: #{tpu_custom_call.1} parent=43 // pred_fallthru
          _
        // Predicated region
        $region53: #{tpu_custom_call.1} parent=43 // pred_check
          %p719 = pneg %p223
        $region54: #{tpu_custom_call.1} parent=43 // pred_check_branch
          %721 = sbr.rel (%p719) target = $region56
        $region55: #{tpu_custom_call.1} parent=43 // pred_region
          %s723 = ssub.s32 512, 512
          %724 = vsyncadd %s700, %s723
          %s725 = smul.addr %s29, 4
          %s726 = smul.addr %s725, 128
          %s727 = scalar_lea.hbm %s7, %s726
          %s728 = sshll.u32 %s703, 4
          %s729 = int_to_ptr.vmem [resolvable:$true] %s728
          %734 = dma.vmem_to_hbm [thread:$0]  %s729, 512, %s727, %s700, 128, 128, 8
        $region56: #{tpu_custom_call.1} parent=43 // pred_fallthru
          _
      $region44: #{tpu_custom_call.1} parent=5 // pred_fallthru
        _
      %p735 = scmp.le.s32.totalorder 2, %s20
      // Predicated region
      $region57: #{tpu_custom_call.1} parent=5 // pred_check
        %p736 = pneg %p735
      $region58: #{tpu_custom_call.1} parent=5 // pred_check_branch
        %738 = sbr.rel (%p736) target = $region60
      $region59: #{tpu_custom_call.1} parent=5 // pred_region
        %s739 = ssub.s32 %s20, 2
        // Predicated region
        $region61: #{tpu_custom_call.1} parent=59 // pred_check
          %p740 = pneg %p203
        $region62: #{tpu_custom_call.1} parent=59 // pred_check_branch
          %742 = sbr.rel (%p740) target = $region64
        $region63: #{tpu_custom_call.1} parent=59 // pred_region
          %s743 = sand.u32 %s188, 1
          %s744 = scalar_lea.sflag [#allocation3], %s743
          %s745 = sand.u32 %s188, 1
          %s746 = smul.addr %s745, 16
          %s747 = scalar_lea.vmem [#allocation2], %s746
          %748 = dma.done %s744, 256
        $region64: #{tpu_custom_call.1} parent=59 // pred_fallthru
          _
        // Predicated region
        $region65: #{tpu_custom_call.1} parent=59 // pred_check
          %p749 = pneg %p229
        $region66: #{tpu_custom_call.1} parent=59 // pred_check_branch
          %751 = sbr.rel (%p749) target = $region68
        $region67: #{tpu_custom_call.1} parent=59 // pred_region
          %s752 = sand.u32 %s214, 1
          %s753 = scalar_lea.sflag [#allocation5], %s752
          %s754 = sand.u32 %s214, 1
          %s755 = smul.addr %s754, 32
          %s756 = scalar_lea.vmem [#allocation4], %s755
          %757 = dma.done %s753, 512
        $region68: #{tpu_custom_call.1} parent=59 // pred_fallthru
          _
      $region60: #{tpu_custom_call.1} parent=5 // pred_fallthru
        _
    $region6: #{tpu_custom_call.1} parent=1 // loop_footer
      %s24 = sadd.s32 1, %s20
    $region7: #{tpu_custom_call.1} parent=1 // loop_footer_branch
      %19 = sbr.rel target = $region3
    $region8: #{tpu_custom_call.1} parent=1 // loop_exit
      _
    %758 = vsyncpa [#allocation3], 1
    %s759 = scalar_lea.sflag [#allocation3], 1
    %760 = vsyncpa %s759, 1
    %761 = vsyncpa [#allocation5], 1
    %s762 = scalar_lea.sflag [#allocation5], 1
    %763 = vsyncpa %s762, 1

</llo_original>
